<compile_context>
chip_gen: v7x
topology: tpu7x:2x2x1
jax: 0.10.0
libtpu: 0.0.40
codegen_flags: <defaults>
</compile_context>

<pallas_src>
import functools
import math

import numpy as np
import jax
import jax.numpy as jnp
from jax import lax
from jax.experimental import pallas as pl
from jax.experimental.pallas import tpu as pltpu

# Module hyper-parameters from __init__ (deterministic, no checkpoint load).
BETA = 0.01          # unused by forward, kept for parity with the module
MIN_MARGIN = 50.0
MAX_MARGIN = 120.0

# Per-buffered-block budget for the sim tile.  8 MiB => ~16 MiB double-buffered
# plus tiny label/output blocks; vmem_limit_bytes is raised explicitly so this
# also fits v5e's 16 MiB scoped default and stays well under v7x's 64 MiB.
# TODO(synk): derive the budget per generation via pltpu.get_tpu_info().
_MAX_BLOCK_BYTES = 8 * 1024 * 1024


def _choose_tile(n, itemsize, max_block_bytes):
    """Square tile edge: full n if it fits one block, else a multiple of 128."""
    if n <= 128 or n * n * itemsize <= max_block_bytes:
        return n                          # block dims == full dims: always legal
    max_t = (int(math.isqrt(max_block_bytes // itemsize)) // 128) * 128
    max_t = max(128, min(max_t, (n // 128) * 128))
    for cand in range(max_t, 127, -128):
        if n % cand == 0:                 # prefer a divisor of n: no ragged edge
            return cand
    return max_t                          # ragged edge masked inside the kernel


def _contrastive_kernel(rtbl_ref, ctbl_ref, sim_ref, trow_ref, tcol_ref,
                        out_ref, *, n, ragged):
    # rtbl/ctbl: (n_pairs,) i32 in SMEM (scalar prefetch) — tile-pair table.
    # sim_ref:  (T, T) caller dtype — sim tile (row block r, col block c).
    # trow_ref: (1, T) i32 — labels of the columns of this tile.
    # tcol_ref: (T, 1) i32 — labels of the rows of this tile.
    # out_ref:  (1, 4) f32 — [sum pos*d1^2, sum neg*d2^2, #pos pairs, 0].
    t = pl.program_id(1)
    tn, tc = sim_ref.shape
    r_blk = rtbl_ref[t]
    c_blk = ctbl_ref[t]

    sim = sim_ref[...].astype(jnp.float32)
    pos = tcol_ref[...] == trow_ref[...]              # (T, T) bool
    d1 = jnp.maximum(sim - MIN_MARGIN, 0.0)
    d2 = jnp.maximum(MAX_MARGIN - sim, 0.0)
    sq1 = d1 * d1
    sq2 = d2 * d2

    # TODO(synk): if v7x profiles still show VALU saturation, offload these
    # reductions to the idle MXU via jnp.dot(masked_tile, ones((T, 1))).
    def emit(pos_m, neg_m):
        p1 = jnp.sum(jnp.where(pos_m, sq1, 0.0))
        p2 = jnp.sum(jnp.where(neg_m, sq2, 0.0))
        cnt = jnp.sum(jnp.where(pos_m, 1.0, 0.0))
        lane = lax.broadcasted_iota(jnp.int32, (1, 4), 1)
        out_ref[...] = jnp.where(
            lane == 0, p1,
            jnp.where(lane == 1, p2,
                      jnp.where(lane == 2, cnt, 0.0)))

    @pl.when(r_blk == c_blk)
    def _diagonal_tile():
        # Strict upper triangle in tile-local coordinates (row0 == col0 here).
        row_loc = lax.broadcasted_iota(jnp.int32, (tn, tc), 0)
        col_loc = lax.broadcasted_iota(jnp.int32, (tn, tc), 1)
        keep = col_loc > row_loc
        if ragged:
            keep = keep & (col_loc < n - c_blk * tc)  # col bound implies row bound
        pos_m = pos & keep
        emit(pos_m, keep ^ pos_m)        # negatives = valid pairs not positive

    @pl.when(r_blk != c_blk)
    def _strictly_upper_tile():
        # Whole tile is above the diagonal: no tri mask needed.
        if ragged:
            col_loc = lax.broadcasted_iota(jnp.int32, (tn, tc), 1)
            keep = col_loc < n - c_blk * tc
            pos_m = pos & keep
            emit(pos_m, keep ^ pos_m)
        else:
            emit(pos, jnp.logical_not(pos))


def contrastive_loss(sim_mat, targets, M, beta=BETA, *,
                     max_block_bytes=_MAX_BLOCK_BYTES):
    """JAX/Pallas equivalent of ContrastiveLoss(beta).forward(sim_mat, targets, M)."""
    del M, beta  # M only contributes a dead `dim = M.shape[1]`; beta unused in forward
    targets = targets.astype(jnp.int32)
    bp, n, _ = sim_mat.shape
    itemsize = sim_mat.dtype.itemsize     # bf16 inputs stream at half the bytes

    t_sz = _choose_tile(n, itemsize, max_block_bytes)
    n_tiles = (n + t_sz - 1) // t_sz
    ragged = (n % t_sz) != 0

    # Host-built upper-triangular tile-pair table (static; DMA'd to SMEM via
    # scalar prefetch and read by every index_map).
    pairs = [(r, c) for r in range(n_tiles) for c in range(r, n_tiles)]
    n_pairs = len(pairs)
    r_tbl = jnp.asarray(np.fromiter((p[0] for p in pairs), np.int32, n_pairs))
    c_tbl = jnp.asarray(np.fromiter((p[1] for p in pairs), np.int32, n_pairs))

    t_row = targets.reshape(bp, 1, n)     # labels along the lane axis (columns j)
    t_col = targets.reshape(bp, n, 1)     # labels of the rows i

    kernel = functools.partial(_contrastive_kernel, n=n, ragged=ragged)

    parts = pl.pallas_call(
        kernel,
        out_shape=jax.ShapeDtypeStruct((bp, n_pairs, 1, 4), jnp.float32),
        grid_spec=pltpu.PrefetchScalarGridSpec(
            num_scalar_prefetch=2,
            grid=(bp, n_pairs),
            in_specs=[
                pl.BlockSpec((None, t_sz, t_sz),
                             lambda b, t, rt, ct: (b, rt[t], ct[t])),
                pl.BlockSpec((None, 1, t_sz),
                             lambda b, t, rt, ct: (b, 0, ct[t])),
                pl.BlockSpec((None, t_sz, 1),
                             lambda b, t, rt, ct: (b, rt[t], 0)),
            ],
            out_specs=pl.BlockSpec((None, None, 1, 4),
                                   lambda b, t, rt, ct: (b, t, 0, 0)),
        ),
        compiler_params=pltpu.CompilerParams(
            dimension_semantics=("parallel", "parallel"),
            vmem_limit_bytes=int(min(2 * t_sz * t_sz * itemsize + (8 << 20),
                                     48 << 20)),
        ),
    )(r_tbl, c_tbl, sim_mat, t_row, t_col)

    parts = parts[:, :, 0, :]                        # (bp, n_pairs, 4)
    num1 = jnp.sum(parts[..., 0], axis=1)            # (bp,)
    num2 = jnp.sum(parts[..., 1], axis=1)
    den1 = jnp.sum(parts[..., 2], axis=1)            # #positive upper-tri pairs
    den2 = (n * (n - 1) / 2.0) - den1                # #negative pairs, exact

    # Matches the PyTorch reference (including NaN if a batch has no
    # positive/negative pairs — same as num/0 there).
    loss1 = jnp.sum(num1 / den1) / bp
    loss2 = jnp.sum(num2 / den2) / bp
    return loss1 + loss2


def _ref_loss_np(sim, tgt):
    """Vectorized numpy mirror of the PyTorch pair-packing loop."""
    bp, n, _ = sim.shape
    iu = np.triu_indices(n, k=1)
    sim_v = sim[:, iu[0], iu[1]].astype(np.float64)
    lab_v = (tgt[:, iu[0]] == tgt[:, iu[1]]).astype(np.float64)
    l1 = np.sum(lab_v * np.maximum(sim_v - MIN_MARGIN, 0.0) ** 2, axis=1) / np.sum(lab_v, axis=1)
    l2 = np.sum((1.0 - lab_v) * np.maximum(MAX_MARGIN - sim_v, 0.0) ** 2, axis=1) / np.sum(1.0 - lab_v, axis=1)
    return (np.sum(l1) + np.sum(l2)) / bp


if __name__ == "__main__":
    key = jax.random.PRNGKey(0)
    k1, k2, k3 = jax.random.split(key, 3)

    # Shapes consistent with the module forward: (bp, n, n) sim, (bp, n) labels.
    bp, n, dim = 2, 8, 32
    sim_mat = jax.random.uniform(k1, (bp, n, n), jnp.float32, minval=20.0, maxval=140.0)
    targets = jnp.tile(jnp.array([0, 0, 1, 1, 2, 2, 3, 3], jnp.int32), (bp, 1))
    M = jax.random.normal(k2, (n, dim), jnp.float32)     # dead input (only shape read)

    loss = jax.block_until_ready(contrastive_loss(sim_mat, targets, M))
    ref = _ref_loss_np(np.asarray(sim_mat), np.asarray(targets))
    np.testing.assert_allclose(float(loss), float(ref), rtol=1e-4, atol=1e-2)

    # Exercise the multi-tile upper-triangular path (diagonal + strictly-upper
    # tiles) by forcing 128x128 tiles on a 256x256 matrix.
    bp2, n2 = 2, 256
    sim2 = jax.random.uniform(k3, (bp2, n2, n2), jnp.float32, minval=20.0, maxval=140.0)
    tgt2 = ((jnp.arange(n2)[None, :] + jnp.arange(bp2)[:, None]) % 7).astype(jnp.int32)
    loss2 = jax.block_until_ready(
        contrastive_loss(sim2, tgt2, M, max_block_bytes=64 * 1024))
    ref2 = _ref_loss_np(np.asarray(sim2), np.asarray(tgt2))
    np.testing.assert_allclose(float(loss2), float(ref2), rtol=1e-3, atol=1e-2)

    print("KERNEL_OK")
</pallas_src>

<mosaic_0001>
module attributes {stable_mosaic.version = 11 : i64} {
  func.func @_contrastive_kernel(%arg0: i32, %arg1: i32, %arg2: memref<1xi32, #tpu.memory_space<smem>>, %arg3: memref<1xi32, #tpu.memory_space<smem>>, %arg4: memref<1x8x8xf32, #tpu.memory_space<vmem>>, %arg5: memref<1x1x8xi32, #tpu.memory_space<vmem>>, %arg6: memref<1x8x1xi32, #tpu.memory_space<vmem>>, %arg7: memref<1x1x1x4xf32, #tpu.memory_space<vmem>>) attributes {dimension_semantics = [#tpu.dimension_semantics<parallel>, #tpu.dimension_semantics<parallel>], iteration_bounds = array<i64: 2, 1>, scalar_prefetch = 2 : i64, scratch_operands = 0 : i64, tpu.core_type = #tpu.core_type<tc>, window_params = [{transform_indices = @transform_0, window_bounds = array<i64: 1, 8, 8>}, {transform_indices = @transform_1, window_bounds = array<i64: 1, 1, 8>}, {transform_indices = @transform_2, window_bounds = array<i64: 1, 8, 1>}, {transform_indices = @transform_3, window_bounds = array<i64: 1, 1, 1, 4>}]} {
    %0 = arith.index_cast %arg1 : i32 to index
    %1 = memref.load %arg2[%0] : memref<1xi32, #tpu.memory_space<smem>>
    %2 = arith.index_cast %arg1 : i32 to index
    %3 = memref.load %arg3[%2] : memref<1xi32, #tpu.memory_space<smem>>
    %c0 = arith.constant 0 : index
    %c0_0 = arith.constant 0 : index
    %c0_1 = arith.constant 0 : index
    %4 = vector.load %arg4[%c0, %c0_0, %c0_1] : memref<1x8x8xf32, #tpu.memory_space<vmem>>, vector<1x8x8xf32>
    %5 = vector.shape_cast %4 : vector<1x8x8xf32> to vector<8x8xf32>
    %c0_2 = arith.constant 0 : index
    %c0_3 = arith.constant 0 : index
    %c0_4 = arith.constant 0 : index
    %6 = vector.load %arg6[%c0_2, %c0_3, %c0_4] : memref<1x8x1xi32, #tpu.memory_space<vmem>>, vector<1x8x1xi32>
    %7 = vector.shape_cast %6 : vector<1x8x1xi32> to vector<8x1xi32>
    %c0_5 = arith.constant 0 : index
    %c0_6 = arith.constant 0 : index
    %c0_7 = arith.constant 0 : index
    %8 = vector.load %arg5[%c0_5, %c0_6, %c0_7] : memref<1x1x8xi32, #tpu.memory_space<vmem>>, vector<1x1x8xi32>
    %9 = vector.shape_cast %8 : vector<1x1x8xi32> to vector<1x8xi32>
    %10 = vector.broadcast %7 : vector<8x1xi32> to vector<8x8xi32>
    %11 = vector.broadcast %9 : vector<1x8xi32> to vector<8x8xi32>
    %12 = arith.cmpi eq, %10, %11 : vector<8x8xi32>
    %cst = arith.constant 5.000000e+01 : f32
    %13 = vector.broadcast %cst : f32 to vector<8x8xf32>
    %14 = arith.subf %5, %13 : vector<8x8xf32>
    %cst_8 = arith.constant 0.000000e+00 : f32
    %15 = vector.broadcast %cst_8 : f32 to vector<8x8xf32>
    %16 = arith.maximumf %14, %15 : vector<8x8xf32>
    %cst_9 = arith.constant 1.200000e+02 : f32
    %17 = vector.broadcast %cst_9 : f32 to vector<8x8xf32>
    %18 = arith.subf %17, %5 : vector<8x8xf32>
    %cst_10 = arith.constant 0.000000e+00 : f32
    %19 = vector.broadcast %cst_10 : f32 to vector<8x8xf32>
    %20 = arith.maximumf %18, %19 : vector<8x8xf32>
    %21 = arith.mulf %16, %16 : vector<8x8xf32>
    %22 = arith.mulf %20, %20 : vector<8x8xf32>
    %23 = arith.cmpi eq, %1, %3 : i32
    %24 = arith.extui %23 : i1 to i32
    %c0_i32 = arith.constant 0 : i32
    %25 = arith.cmpi ne, %24, %c0_i32 : i32
    scf.if %25 {
      %29 = tpu.iota {dimensions = array<i32: 0>} : vector<8x8xi32>
      %30 = tpu.iota {dimensions = array<i32: 1>} : vector<8x8xi32>
      %31 = arith.cmpi sgt, %30, %29 : vector<8x8xi32>
      %32 = arith.andi %12, %31 : vector<8x8xi1>
      %33 = arith.xori %31, %32 : vector<8x8xi1>
      %cst_12 = arith.constant 0.000000e+00 : f32
      %34 = vector.broadcast %cst_12 : f32 to vector<8x8xf32>
      %35 = arith.select %32, %21, %34 : vector<8x8xi1>, vector<8x8xf32>
      %36 = vector.shape_cast %35 : vector<8x8xf32> to vector<1x8x8xf32>
      %cst_13 = arith.constant dense<0.000000e+00> : vector<1xf32>
      %37 = vector.multi_reduction <add>, %36, %cst_13 [1, 2] : vector<1x8x8xf32> to vector<1xf32>
      %38 = vector.shape_cast %37 : vector<1xf32> to vector<1x1x1xf32>
      %39 = vector.extract %38[0, 0, 0] : f32 from vector<1x1x1xf32>
      %cst_14 = arith.constant 0.000000e+00 : f32
      %40 = vector.broadcast %cst_14 : f32 to vector<8x8xf32>
      %41 = arith.select %33, %22, %40 : vector<8x8xi1>, vector<8x8xf32>
      %42 = vector.shape_cast %41 : vector<8x8xf32> to vector<1x8x8xf32>
      %cst_15 = arith.constant dense<0.000000e+00> : vector<1xf32>
      %43 = vector.multi_reduction <add>, %42, %cst_15 [1, 2] : vector<1x8x8xf32> to vector<1xf32>
      %44 = vector.shape_cast %43 : vector<1xf32> to vector<1x1x1xf32>
      %45 = vector.extract %44[0, 0, 0] : f32 from vector<1x1x1xf32>
      %cst_16 = arith.constant 1.000000e+00 : f32
      %cst_17 = arith.constant 0.000000e+00 : f32
      %46 = vector.broadcast %cst_16 : f32 to vector<8x8xf32>
      %47 = vector.broadcast %cst_17 : f32 to vector<8x8xf32>
      %48 = arith.select %32, %46, %47 : vector<8x8xi1>, vector<8x8xf32>
      %49 = vector.shape_cast %48 : vector<8x8xf32> to vector<1x8x8xf32>
      %cst_18 = arith.constant dense<0.000000e+00> : vector<1xf32>
      %50 = vector.multi_reduction <add>, %49, %cst_18 [1, 2] : vector<1x8x8xf32> to vector<1xf32>
      %51 = vector.shape_cast %50 : vector<1xf32> to vector<1x1x1xf32>
      %52 = vector.extract %51[0, 0, 0] : f32 from vector<1x1x1xf32>
      %53 = tpu.iota {dimensions = array<i32: 1>} : vector<1x4xi32>
      %c0_i32_19 = arith.constant 0 : i32
      %54 = vector.broadcast %c0_i32_19 : i32 to vector<1x4xi32>
      %55 = arith.cmpi eq, %53, %54 : vector<1x4xi32>
      %c1_i32 = arith.constant 1 : i32
      %56 = vector.broadcast %c1_i32 : i32 to vector<1x4xi32>
      %57 = arith.cmpi eq, %53, %56 : vector<1x4xi32>
      %c2_i32 = arith.constant 2 : i32
      %58 = vector.broadcast %c2_i32 : i32 to vector<1x4xi32>
      %59 = arith.cmpi eq, %53, %58 : vector<1x4xi32>
      %cst_20 = arith.constant 0.000000e+00 : f32
      %60 = vector.broadcast %52 : f32 to vector<1x4xf32>
      %61 = vector.broadcast %cst_20 : f32 to vector<1x4xf32>
      %62 = arith.select %59, %60, %61 : vector<1x4xi1>, vector<1x4xf32>
      %63 = vector.broadcast %45 : f32 to vector<1x4xf32>
      %64 = arith.select %57, %63, %62 : vector<1x4xi1>, vector<1x4xf32>
      %65 = vector.broadcast %39 : f32 to vector<1x4xf32>
      %66 = arith.select %55, %65, %64 : vector<1x4xi1>, vector<1x4xf32>
      %c0_21 = arith.constant 0 : index
      %c0_22 = arith.constant 0 : index
      %c0_23 = arith.constant 0 : index
      %c0_24 = arith.constant 0 : index
      %67 = vector.load %arg7[%c0_21, %c0_22, %c0_23, %c0_24] : memref<1x1x1x4xf32, #tpu.memory_space<vmem>>, vector<1x1x1x4xf32>
      %68 = vector.shape_cast %67 : vector<1x1x1x4xf32> to vector<1x4xf32>
      %69 = vector.shape_cast %66 : vector<1x4xf32> to vector<1x1x1x4xf32>
      tpu.vector_store %arg7[%c0_21, %c0_22, %c0_23, %c0_24], %69 {strides = array<i32>} : memref<1x1x1x4xf32, #tpu.memory_space<vmem>>, vector<1x1x1x4xf32>,
    } else {
    }
    %26 = arith.cmpi ne, %1, %3 : i32
    %27 = arith.extui %26 : i1 to i32
    %c0_i32_11 = arith.constant 0 : i32
    %28 = arith.cmpi ne, %27, %c0_i32_11 : i32
    scf.if %28 {
      %cst_12 = arith.constant dense<true> : vector<8x8xi1>
      %29 = arith.xori %12, %cst_12 : vector<8x8xi1>
      %cst_13 = arith.constant 0.000000e+00 : f32
      %30 = vector.broadcast %cst_13 : f32 to vector<8x8xf32>
      %31 = arith.select %12, %21, %30 : vector<8x8xi1>, vector<8x8xf32>
      %32 = vector.shape_cast %31 : vector<8x8xf32> to vector<1x8x8xf32>
      %cst_14 = arith.constant dense<0.000000e+00> : vector<1xf32>
      %33 = vector.multi_reduction <add>, %32, %cst_14 [1, 2] : vector<1x8x8xf32> to vector<1xf32>
      %34 = vector.shape_cast %33 : vector<1xf32> to vector<1x1x1xf32>
      %35 = vector.extract %34[0, 0, 0] : f32 from vector<1x1x1xf32>
      %cst_15 = arith.constant 0.000000e+00 : f32
      %36 = vector.broadcast %cst_15 : f32 to vector<8x8xf32>
      %37 = arith.select %29, %22, %36 : vector<8x8xi1>, vector<8x8xf32>
      %38 = vector.shape_cast %37 : vector<8x8xf32> to vector<1x8x8xf32>
      %cst_16 = arith.constant dense<0.000000e+00> : vector<1xf32>
      %39 = vector.multi_reduction <add>, %38, %cst_16 [1, 2] : vector<1x8x8xf32> to vector<1xf32>
      %40 = vector.shape_cast %39 : vector<1xf32> to vector<1x1x1xf32>
      %41 = vector.extract %40[0, 0, 0] : f32 from vector<1x1x1xf32>
      %cst_17 = arith.constant 1.000000e+00 : f32
      %cst_18 = arith.constant 0.000000e+00 : f32
      %42 = vector.broadcast %cst_17 : f32 to vector<8x8xf32>
      %43 = vector.broadcast %cst_18 : f32 to vector<8x8xf32>
      %44 = arith.select %12, %42, %43 : vector<8x8xi1>, vector<8x8xf32>
      %45 = vector.shape_cast %44 : vector<8x8xf32> to vector<1x8x8xf32>
      %cst_19 = arith.constant dense<0.000000e+00> : vector<1xf32>
      %46 = vector.multi_reduction <add>, %45, %cst_19 [1, 2] : vector<1x8x8xf32> to vector<1xf32>
      %47 = vector.shape_cast %46 : vector<1xf32> to vector<1x1x1xf32>
      %48 = vector.extract %47[0, 0, 0] : f32 from vector<1x1x1xf32>
      %49 = tpu.iota {dimensions = array<i32: 1>} : vector<1x4xi32>
      %c0_i32_20 = arith.constant 0 : i32
      %50 = vector.broadcast %c0_i32_20 : i32 to vector<1x4xi32>
      %51 = arith.cmpi eq, %49, %50 : vector<1x4xi32>
      %c1_i32 = arith.constant 1 : i32
      %52 = vector.broadcast %c1_i32 : i32 to vector<1x4xi32>
      %53 = arith.cmpi eq, %49, %52 : vector<1x4xi32>
      %c2_i32 = arith.constant 2 : i32
      %54 = vector.broadcast %c2_i32 : i32 to vector<1x4xi32>
      %55 = arith.cmpi eq, %49, %54 : vector<1x4xi32>
      %cst_21 = arith.constant 0.000000e+00 : f32
      %56 = vector.broadcast %48 : f32 to vector<1x4xf32>
      %57 = vector.broadcast %cst_21 : f32 to vector<1x4xf32>
      %58 = arith.select %55, %56, %57 : vector<1x4xi1>, vector<1x4xf32>
      %59 = vector.broadcast %41 : f32 to vector<1x4xf32>
      %60 = arith.select %53, %59, %58 : vector<1x4xi1>, vector<1x4xf32>
      %61 = vector.broadcast %35 : f32 to vector<1x4xf32>
      %62 = arith.select %51, %61, %60 : vector<1x4xi1>, vector<1x4xf32>
      %c0_22 = arith.constant 0 : index
      %c0_23 = arith.constant 0 : index
      %c0_24 = arith.constant 0 : index
      %c0_25 = arith.constant 0 : index
      %63 = vector.load %arg7[%c0_22, %c0_23, %c0_24, %c0_25] : memref<1x1x1x4xf32, #tpu.memory_space<vmem>>, vector<1x1x1x4xf32>
      %64 = vector.shape_cast %63 : vector<1x1x1x4xf32> to vector<1x4xf32>
      %65 = vector.shape_cast %62 : vector<1x4xf32> to vector<1x1x1x4xf32>
      tpu.vector_store %arg7[%c0_22, %c0_23, %c0_24, %c0_25], %65 {strides = array<i32>} : memref<1x1x1x4xf32, #tpu.memory_space<vmem>>, vector<1x1x1x4xf32>,
    } else {
    }
    return
  }
  func.func @transform_0(%arg0: i32, %arg1: i32, %arg2: memref<1xi32, #tpu.memory_space<smem>>, %arg3: memref<1xi32, #tpu.memory_space<smem>>) -> (i32, i32, i32) {
    %0 = arith.index_cast %arg1 : i32 to index
    %1 = memref.load %arg2[%0] : memref<1xi32, #tpu.memory_space<smem>>
    %2 = arith.index_cast %arg1 : i32 to index
    %3 = memref.load %arg3[%2] : memref<1xi32, #tpu.memory_space<smem>>
    %c0_i32 = arith.constant 0 : i32
    return %arg0, %1, %3 : i32, i32, i32
  }
  func.func @transform_1(%arg0: i32, %arg1: i32, %arg2: memref<1xi32, #tpu.memory_space<smem>>, %arg3: memref<1xi32, #tpu.memory_space<smem>>) -> (i32, i32, i32) {
    %0 = arith.index_cast %arg1 : i32 to index
    %1 = memref.load %arg3[%0] : memref<1xi32, #tpu.memory_space<smem>>
    %c0_i32 = arith.constant 0 : i32
    %c0_i32_0 = arith.constant 0 : i32
    return %arg0, %c0_i32, %1 : i32, i32, i32
  }
  func.func @transform_2(%arg0: i32, %arg1: i32, %arg2: memref<1xi32, #tpu.memory_space<smem>>, %arg3: memref<1xi32, #tpu.memory_space<smem>>) -> (i32, i32, i32) {
    %0 = arith.index_cast %arg1 : i32 to index
    %1 = memref.load %arg2[%0] : memref<1xi32, #tpu.memory_space<smem>>
    %c0_i32 = arith.constant 0 : i32
    %c0_i32_0 = arith.constant 0 : i32
    return %arg0, %1, %c0_i32 : i32, i32, i32
  }
  func.func @transform_3(%arg0: i32, %arg1: i32, %arg2: memref<1xi32, #tpu.memory_space<smem>>, %arg3: memref<1xi32, #tpu.memory_space<smem>>) -> (i32, i32, i32, i32) {
    %c0_i32 = arith.constant 0 : i32
    %c0_i32_0 = arith.constant 0 : i32
    %c0_i32_1 = arith.constant 0 : i32
    return %arg0, %arg1, %c0_i32, %c0_i32_0 : i32, i32, i32, i32
  }
}

</mosaic_0001>

<llo_original>
// kernel: tpu_custom_call.1
$region0: #{tpu_custom_call.1}
  #allocation0 [shape = 'u32[]', space=smem, size = 0x4, offset = 0x4, fixed_abs, tag = 'smem constant byte address 0x4 - core index']
  #allocation1 [shape = 'u32[144,128]{1,0:T(1,128)}', space=vmem, size = 0x12000, scoped, tag = 'internal scratch']
  #allocation2 [shape = 's32[1]{0}', space=sflag, size = 0x4, scoped, tag = 'scoped memory for tpu_custom_call.1']
  #allocation3 [shape = 's32[1]{0:T(128)S(6)}', space=smem, size = 0x200, scoped, tag = 'prefetched SMEM operand 0']
  #allocation4 [shape = 's32[1]{0:T(128)S(6)}', space=smem, size = 0x200, scoped, tag = 'prefetched SMEM operand 1']
  %s0 = inlined_call_operand.<no memory space> [shape: s32[1], index: 0, kind: input, shape index: {}]
  %s1 = inlined_call_operand.<no memory space> [shape: s32[1], index: 1, kind: input, shape index: {}]
  %s2 = inlined_call_operand.vmem [shape: f32[2,8,8], index: 2, kind: input, shape index: {}]
  %s3 = inlined_call_operand.vmem [shape: s32[2,1,8], index: 3, kind: input, shape index: {}]
  %s4 = inlined_call_operand.vmem [shape: s32[2,8,1], index: 4, kind: input, shape index: {}]
  %s5 = inlined_call_operand.hbm [shape: f32[2,1,1,4], index: 5, kind: output, shape index: {}]
  %s6 = sld [smem:[#allocation0]]
  $region53: #{tpu_custom_call.1} parent=0
    _
  %s8 = ssub.s32 1, %s6
  %s9 = scalar_select 0, %s8, %s6
  %10 = sst [smem:[#allocation3]] %s0
  %11 = sst [smem:[#allocation4]] %s1
  $region1: #{tpu_custom_call.1} parent=0
    #allocation5 [shape = 'u8[1024]{0}', space=vmem, size = 0x400, scoped, tag = 'output window, operand 0']
    #allocation6 [shape = 's32[2]{0}', space=sflag, size = 0x8, scoped, tag = 'scoped memory for tpu_custom_call.1']
    %12 = vsyncpa [#allocation6], 0
    %s13 = scalar_lea.sflag [#allocation6], 1
    %14 = vsyncpa %s13, 0
    loop: start=0, step=1, limit=4
    $region2: #{tpu_custom_call.1} parent=1 // loop_pre_header
      _
    $region3: #{tpu_custom_call.1} parent=1 // loop_header
      %s16 = sphi 0, %s20
      %p17 = scmp.ge.s32.totalorder %s16, 4
      %s23 = sphi 0, %s35
      %s24 = sphi 0, %s31
      %s25 = sphi 0, %s23
      %s26 = sphi 0, %s24
      %s27 = sphi 0, %s25
      %s28 = sphi 0, %s26
      %s46 = sphi 0, %s48
      %s49 = sphi 0, %s46
      %s50 = sphi 0, %s49
      %s66 = sphi 0, %s50
      %s76 = sphi 0, %s78
      %s79 = sphi 0, %s76
      %s80 = sphi 0, %s79
      %s96 = sphi 0, %s80
      %s106 = sphi 0, %s108
      %s109 = sphi 0, %s106
      %s110 = sphi 0, %s109
      %s126 = sphi 0, %s110
      %s134 = sphi 0, %s136
      %s137 = sphi 0, %s134
      %s138 = sphi 0, %s137
      %s154 = sphi 0, %s138
    $region4: #{tpu_custom_call.1} parent=1 // loop_header_branch
      %19 = sbr.rel (%p17) target = $region8
    $region5: #{tpu_custom_call.1} parent=1 // loop_body
      %s21 = ssub.s32 %s16, 1
      %s22 = ssub.s32 %s16, 2
      %s29 = sadd.s32 1, %s24
      %p30 = scmp.ge.s32.totalorder %s29, 1
      %s31 = scalar_select %p30, 0, %s29
      %s32 = sadd.s32 1, %s23
      %s33 = scalar_select %p30, %s32, %s23
      %p34 = scmp.ge.s32.totalorder %s33, 2
      %s35 = scalar_select %p34, 0, %s33
      %s36 = sld [smem:[#allocation3 + %s24]]
      %s37 = sld [smem:[#allocation4 + %s24]]
      %s38 = sld [smem:[#allocation3 + %s31]]
      %s39 = sld [smem:[#allocation4 + %s31]]
      %s40 = ssub.s32 %s23, %s35
      %s41 = ssub.s32 %s36, %s38
      %s42 = sor.u32 %s40, %s41
      %s43 = ssub.s32 %s37, %s39
      %s44 = sor.u32 %s42, %s43
      %p45 = scmp.eq.s32.totalorder %s44, 0
      %s47 = sadd.s32 %s46, 1
      %s48 = scalar_select %p45, %s46, %s47
      %p51 = pneg %p45
      %p52 = scmp.eq.s32.totalorder %s16, 1
      %p53 = por %p51, %p52
      %p54 = scmp.ne.s32.totalorder %s46, %s49
      %p55 = scmp.eq.s32.totalorder %s16, 0
      %p56 = por %p54, %p55
      %p57 = scmp.ne.s32.totalorder %s46, %s49
      %p58 = scmp.eq.s32.totalorder %s21, 1
      %p59 = por %p57, %p58
      %p60 = scmp.ne.s32.totalorder %s49, %s50
      %p61 = scmp.eq.s32.totalorder %s21, 0
      %p62 = por %p60, %p61
      %p63 = scmp.ne.s32.totalorder %s49, %s50
      %p64 = scmp.eq.s32.totalorder %s22, 1
      %p65 = por %p63, %p64
      %p67 = scmp.ne.s32.totalorder %s50, %s66
      %p68 = scmp.eq.s32.totalorder %s22, 0
      %p69 = por %p67, %p68
      %s70 = sld [smem:[#allocation4 + %s24]]
      %s71 = sld [smem:[#allocation4 + %s31]]
      %s72 = ssub.s32 %s23, %s35
      %s73 = ssub.s32 %s70, %s71
      %s74 = sor.u32 %s72, %s73
      %p75 = scmp.eq.s32.totalorder %s74, 0
      %s77 = sadd.s32 %s76, 1
      %s78 = scalar_select %p75, %s76, %s77
      %p81 = pneg %p75
      %p82 = scmp.eq.s32.totalorder %s16, 1
      %p83 = por %p81, %p82
      %p84 = scmp.ne.s32.totalorder %s76, %s79
      %p85 = scmp.eq.s32.totalorder %s16, 0
      %p86 = por %p84, %p85
      %p87 = scmp.ne.s32.totalorder %s76, %s79
      %p88 = scmp.eq.s32.totalorder %s21, 1
      %p89 = por %p87, %p88
      %p90 = scmp.ne.s32.totalorder %s79, %s80
      %p91 = scmp.eq.s32.totalorder %s21, 0
      %p92 = por %p90, %p91
      %p93 = scmp.ne.s32.totalorder %s79, %s80
      %p94 = scmp.eq.s32.totalorder %s22, 1
      %p95 = por %p93, %p94
      %p97 = scmp.ne.s32.totalorder %s80, %s96
      %p98 = scmp.eq.s32.totalorder %s22, 0
      %p99 = por %p97, %p98
      %s100 = sld [smem:[#allocation3 + %s24]]
      %s101 = sld [smem:[#allocation3 + %s31]]
      %s102 = ssub.s32 %s23, %s35
      %s103 = ssub.s32 %s100, %s101
      %s104 = sor.u32 %s102, %s103
      %p105 = scmp.eq.s32.totalorder %s104, 0
      %s107 = sadd.s32 %s106, 1
      %s108 = scalar_select %p105, %s106, %s107
      %p111 = pneg %p105
      %p112 = scmp.eq.s32.totalorder %s16, 1
      %p113 = por %p111, %p112
      %p114 = scmp.ne.s32.totalorder %s106, %s109
      %p115 = scmp.eq.s32.totalorder %s16, 0
      %p116 = por %p114, %p115
      %p117 = scmp.ne.s32.totalorder %s106, %s109
      %p118 = scmp.eq.s32.totalorder %s21, 1
      %p119 = por %p117, %p118
      %p120 = scmp.ne.s32.totalorder %s109, %s110
      %p121 = scmp.eq.s32.totalorder %s21, 0
      %p122 = por %p120, %p121
      %p123 = scmp.ne.s32.totalorder %s109, %s110
      %p124 = scmp.eq.s32.totalorder %s22, 1
      %p125 = por %p123, %p124
      %p127 = scmp.ne.s32.totalorder %s110, %s126
      %p128 = scmp.eq.s32.totalorder %s22, 0
      %p129 = por %p127, %p128
      %s130 = ssub.s32 %s23, %s35
      %s131 = ssub.s32 %s24, %s31
      %s132 = sor.u32 %s130, %s131
      %p133 = scmp.eq.s32.totalorder %s132, 0
      %s135 = sadd.s32 %s134, 1
      %s136 = scalar_select %p133, %s134, %s135
      %p139 = pneg %p133
      %p140 = scmp.eq.s32.totalorder %s16, 1
      %p141 = por %p139, %p140
      %p142 = scmp.ne.s32.totalorder %s134, %s137
      %p143 = scmp.eq.s32.totalorder %s16, 0
      %p144 = por %p142, %p143
      %p145 = scmp.ne.s32.totalorder %s134, %s137
      %p146 = scmp.eq.s32.totalorder %s21, 1
      %p147 = por %p145, %p146
      %p148 = scmp.ne.s32.totalorder %s137, %s138
      %p149 = scmp.eq.s32.totalorder %s21, 0
      %p150 = por %p148, %p149
      %p151 = scmp.ne.s32.totalorder %s137, %s138
      %p152 = scmp.eq.s32.totalorder %s22, 1
      %p153 = por %p151, %p152
      %p155 = scmp.ne.s32.totalorder %s138, %s154
      %p156 = scmp.eq.s32.totalorder %s22, 0
      %p157 = por %p155, %p156
      %p158 = scmp.le.s32.totalorder 1, %s16
      %p159 = scmp.lt.s32.totalorder %s16, 3
      %p160 = pnand %p158, %p159
      %p161 = pneg %p160
      // Predicated region
      $region9: #{tpu_custom_call.1} parent=5 // pred_check
        _
      $region10: #{tpu_custom_call.1} parent=5 // pred_check_branch
        %163 = sbr.rel (%p160) target = $region12
      $region11: #{tpu_custom_call.1} parent=5 // pred_region
        %s164 = ssub.s32 %s16, 1
      $region12: #{tpu_custom_call.1} parent=5 // pred_fallthru
        _
      %p165 = scmp.lt.s32.totalorder %s16, 2
      // Predicated region
      $region13: #{tpu_custom_call.1} parent=5 // pred_check
        %p166 = pneg %p165
      $region14: #{tpu_custom_call.1} parent=5 // pred_check_branch
        %168 = sbr.rel (%p166) target = $region16
      $region15: #{tpu_custom_call.1} parent=5 // pred_region
        // Predicated region
        $region17: #{tpu_custom_call.1} parent=15 // pred_check
          %p169 = pneg %p56
        $region18: #{tpu_custom_call.1} parent=15 // pred_check_branch
          %171 = sbr.rel (%p169) target = $region20
        $region19: #{tpu_custom_call.1} parent=15 // pred_region
          %s172 = sld [smem:[#allocation3 + %s24]]
          %s173 = sld [smem:[#allocation4 + %s24]]
          %p174 = scmp.lt.s32.totalorder %s23, 1
          %s175 = scalar_select %p174, %s23, 1
          %p176 = scmp.lt.s32.totalorder %s172, 0
          %s177 = scalar_select %p176, %s172, 0
          %p178 = scmp.lt.s32.totalorder %s173, 0
          %s179 = scalar_select %p178, %s173, 0
          %s180 = sadd.s32 %s179, %s177
          %s181 = sadd.s32 %s180, %s175
          %s182 = smul.addr %s181, 8
          %s183 = scalar_lea.vmem %s2, %s182
          %s184 = sld [smem:[#allocation3 + %s24]]
          %s185 = sld [smem:[#allocation4 + %s24]]
        $region20: #{tpu_custom_call.1} parent=15 // pred_fallthru
          _
        // Predicated region
        $region21: #{tpu_custom_call.1} parent=15 // pred_check
          %p186 = pneg %p86
        $region22: #{tpu_custom_call.1} parent=15 // pred_check_branch
          %188 = sbr.rel (%p186) target = $region24
        $region23: #{tpu_custom_call.1} parent=15 // pred_region
          %s189 = sld [smem:[#allocation4 + %s24]]
          %p190 = scmp.lt.s32.totalorder %s23, 1
          %s191 = scalar_select %p190, %s23, 1
          %p192 = scmp.lt.s32.totalorder %s189, 0
          %s193 = scalar_select %p192, %s189, 0
          %s194 = sadd.s32 %s193, %s191
          %s195 = scalar_lea.vmem %s3, %s194
          %s196 = sld [smem:[#allocation4 + %s24]]
        $region24: #{tpu_custom_call.1} parent=15 // pred_fallthru
          _
        // Predicated region
        $region25: #{tpu_custom_call.1} parent=15 // pred_check
          %p197 = pneg %p116
        $region26: #{tpu_custom_call.1} parent=15 // pred_check_branch
          %199 = sbr.rel (%p197) target = $region28
        $region27: #{tpu_custom_call.1} parent=15 // pred_region
          %s200 = sld [smem:[#allocation3 + %s24]]
          %p201 = scmp.lt.s32.totalorder %s23, 1
          %s202 = scalar_select %p201, %s23, 1
          %p203 = scmp.lt.s32.totalorder %s200, 0
          %s204 = scalar_select %p203, %s200, 0
          %s205 = sadd.s32 %s204, %s202
          %s206 = smul.addr %s205, 8
          %s207 = scalar_lea.vmem %s4, %s206
          %s208 = sld [smem:[#allocation3 + %s24]]
        $region28: #{tpu_custom_call.1} parent=15 // pred_fallthru
          _
      $region16: #{tpu_custom_call.1} parent=5 // pred_fallthru
        _
      %p209 = scmp.le.s32.totalorder 1, %s16
      %p210 = scmp.lt.s32.totalorder %s16, 3
      %p211 = pnand %p209, %p210
      %p212 = pneg %p211
      // Predicated region
      $region29: #{tpu_custom_call.1} parent=5 // pred_check
        _
      $region30: #{tpu_custom_call.1} parent=5 // pred_check_branch
        %214 = sbr.rel (%p211) target = $region32
      $region31: #{tpu_custom_call.1} parent=5 // pred_region
        %s215 = ssub.s32 %s16, 1
        %s216 = sld [smem:[#allocation3 + %s26]]
        %s217 = sld [smem:[#allocation4 + %s26]]
        %p218 = scmp.lt.s32.totalorder %s25, 1
        %s219 = scalar_select %p218, %s25, 1
        %p220 = scmp.lt.s32.totalorder %s216, 0
        %s221 = scalar_select %p220, %s216, 0
        %p222 = scmp.lt.s32.totalorder %s217, 0
        %s223 = scalar_select %p222, %s217, 0
        %s224 = sadd.s32 %s223, %s221
        %s225 = sadd.s32 %s224, %s219
        %s226 = smul.addr %s225, 8
        %s227 = scalar_lea.vmem %s2, %s226
        %p228 = pneg %p62
        %p229 = pneg %p59
        %s230 = sld [smem:[#allocation4 + %s26]]
        %p231 = scmp.lt.s32.totalorder %s25, 1
        %s232 = scalar_select %p231, %s25, 1
        %p233 = scmp.lt.s32.totalorder %s230, 0
        %s234 = scalar_select %p233, %s230, 0
        %s235 = sadd.s32 %s234, %s232
        %s236 = scalar_lea.vmem %s3, %s235
        %p237 = pneg %p92
        %p238 = pneg %p89
        %s239 = sld [smem:[#allocation3 + %s26]]
        %p240 = scmp.lt.s32.totalorder %s25, 1
        %s241 = scalar_select %p240, %s25, 1
        %p242 = scmp.lt.s32.totalorder %s239, 0
        %s243 = scalar_select %p242, %s239, 0
        %s244 = sadd.s32 %s243, %s241
        %s245 = smul.addr %s244, 8
        %s246 = scalar_lea.vmem %s4, %s245
        %p247 = pneg %p122
        %p248 = pneg %p119
        %p249 = pneg %p150
        %p250 = pneg %p147
        %s251 = sand.u32 %s137, 1
        %s252 = scalar_lea.sflag [#allocation6], %s251
        %s253 = sand.u32 %s137, 1
        %s254 = scalar_lea.vmem [#allocation5], %s253
        %s255 = sld [smem:[#allocation3 + %s26]]
        %s256 = sld [smem:[#allocation4 + %s26]]
        %p257 = scmp.lt.s32.totalorder %s25, 1
        %s258 = scalar_select %p257, %s25, 1
        %p259 = scmp.lt.s32.totalorder %s255, 0
        %s260 = scalar_select %p259, %s255, 0
        %p261 = scmp.lt.s32.totalorder %s256, 0
        %s262 = scalar_select %p261, %s256, 0
        %s263 = sadd.s32 %s262, %s260
        %s264 = sadd.s32 %s263, %s258
        %s265 = smul.addr %s264, 8
        %s266 = scalar_lea.vmem %s2, %s265
        %s267 = sld [smem:[#allocation3 + %s26]]
        %s268 = sld [smem:[#allocation4 + %s26]]
        %s269 = sld [smem:[#allocation4 + %s26]]
        %p270 = scmp.lt.s32.totalorder %s25, 1
        %s271 = scalar_select %p270, %s25, 1
        %p272 = scmp.lt.s32.totalorder %s269, 0
        %s273 = scalar_select %p272, %s269, 0
        %s274 = sadd.s32 %s273, %s271
        %s275 = scalar_lea.vmem %s3, %s274
        %s276 = sld [smem:[#allocation4 + %s26]]
        %s277 = sld [smem:[#allocation3 + %s26]]
        %p278 = scmp.lt.s32.totalorder %s25, 1
        %s279 = scalar_select %p278, %s25, 1
        %p280 = scmp.lt.s32.totalorder %s277, 0
        %s281 = scalar_select %p280, %s277, 0
        %s282 = sadd.s32 %s281, %s279
        %s283 = smul.addr %s282, 8
        %s284 = scalar_lea.vmem %s4, %s283
        %s285 = sld [smem:[#allocation3 + %s26]]
        %s286 = sld [smem:[#allocation3 + %s26]]
        %s287 = sld [smem:[#allocation4 + %s26]]
        %v288 = vld [vmem:[%s266] sm:$0xff]
        %v289 = vld [vmem:[%s284] sm:$0xff]
        %v290 = vld [vmem:[%s275] sm:$0x1]
        %291 = vset.pattern.permute.xlu0 0
        %292 = vperm.xlu0 %291, %v289
        %v293 = vpop.permute.xlu0 %292
        %v294 = vlaneseq
        %v295 = vshrl.u32 %v294, 7
        %v296 = vsub.s32 0, %v295
        %v297 = vrot.slane %v290, %v296
        %vm298 = vcmp.eq.s32.totalorder %v293, %v297
        %v299 = vsub.f32 %v288, 50.0
        %v300 = vmax.f32 %v299, 0.0
        %v301 = vsub.f32 120.0, %v288
        %v302 = vmax.f32 %v301, 0.0
        %v303 = vmul.f32 %v300, %v300
        %v304 = vmul.f32 %v302, %v302
        %p305 = scmp.eq.s32.totalorder %s286, %s287
        // Predicated region
        $region33: #{tpu_custom_call.1} parent=31 // pred_check
          %p306 = pneg %p305
        $region34: #{tpu_custom_call.1} parent=31 // pred_check_branch
          %308 = sbr.rel (%p306) target = $region36
        $region35: #{tpu_custom_call.1} parent=31 // pred_region
          %v309 = vlaneseq
          %v310 = vshrl.u32 %v309, 7
          %v311 = vlaneseq
          %v312 = vand.u32 %v311, 127
          %vm313 = vcmp.gt.s32.totalorder %v312, %v310
          %vm314 = vmand %vm298, %vm313
          %vm315 = vmxor %vm313, %vm314
          %v316 = vsel %vm314, %v303, 0.0
          %vm317 = vcmask 64512
          %v318 = vsel %vm317, %v316, 0.0
          %319 = vadd.xlane.f32.xlu0 %v318
          %v320 = vpop.xlane.xlu0 %319
          %v321 = vrot.slane %v320, 4
          %v322 = vadd.f32 %v320, %v321
          %v323 = vrot.slane %v322, 2
          %v324 = vadd.f32 %v322, %v323
          %v325 = vrot.slane %v324, 1
          %v326 = vadd.f32 %v324, %v325
          %s327 = vtos %v326
          %v328 = vsel %vm315, %v304, 0.0
          %v329 = vsel %vm317, %v328, 0.0
          %330 = vadd.xlane.f32.xlu0 %v329
          %v331 = vpop.xlane.xlu0 %330
          %v332 = vrot.slane %v331, 4
          %v333 = vadd.f32 %v331, %v332
          %v334 = vrot.slane %v333, 2
          %v335 = vadd.f32 %v333, %v334
          %v336 = vrot.slane %v335, 1
          %v337 = vadd.f32 %v335, %v336
          %s338 = vtos %v337
          %v339 = vsel %vm314, 1.0, 0.0
          %v340 = vsel %vm317, %v339, 0.0
          %341 = vadd.xlane.f32.xlu0 %v340
          %v342 = vpop.xlane.xlu0 %341
          %v343 = vrot.slane %v342, 4
          %v344 = vadd.f32 %v342, %v343
          %v345 = vrot.slane %v344, 2
          %v346 = vadd.f32 %v344, %v345
          %v347 = vrot.slane %v346, 1
          %v348 = vadd.f32 %v346, %v347
          %s349 = vtos %v348
          %vm350 = vcmp.eq.s32.totalorder %v312, 0
          %vm351 = vcmp.eq.s32.totalorder %v312, 1
          %vm352 = vcmp.eq.s32.totalorder %v312, 2
          %v353 = vstv %s349
          %v354 = vsel %vm352, %v353, 0.0
          %v355 = vstv %s338
          %v356 = vsel %vm351, %v355, %v354
          %v357 = vstv %s327
          %v358 = vsel %vm350, %v357, %v356
          %vm359 = vcmask 24576
          %360 = vst.msk [vmem:[%s254] sm:$0x1] %vm359, %v358
        $region36: #{tpu_custom_call.1} parent=31 // pred_fallthru
          _
        %p361 = scmp.ne.s32.totalorder %s286, %s287
        // Predicated region
        $region37: #{tpu_custom_call.1} parent=31 // pred_check
          %p362 = pneg %p361
        $region38: #{tpu_custom_call.1} parent=31 // pred_check_branch
          %364 = sbr.rel (%p362) target = $region40
        $region39: #{tpu_custom_call.1} parent=31 // pred_region
          %vm365 = vmxor %vm298, 1
          %v366 = vsel %vm298, %v303, 0.0
          %vm367 = vcmask 64512
          %v368 = vsel %vm367, %v366, 0.0
          %369 = vadd.xlane.f32.xlu0 %v368
          %v370 = vpop.xlane.xlu0 %369
          %v371 = vrot.slane %v370, 4
          %v372 = vadd.f32 %v370, %v371
          %v373 = vrot.slane %v372, 2
          %v374 = vadd.f32 %v372, %v373
          %v375 = vrot.slane %v374, 1
          %v376 = vadd.f32 %v374, %v375
          %s377 = vtos %v376
          %v378 = vsel %vm365, %v304, 0.0
          %v379 = vsel %vm367, %v378, 0.0
          %380 = vadd.xlane.f32.xlu0 %v379
          %v381 = vpop.xlane.xlu0 %380
          %v382 = vrot.slane %v381, 4
          %v383 = vadd.f32 %v381, %v382
          %v384 = vrot.slane %v383, 2
          %v385 = vadd.f32 %v383, %v384
          %v386 = vrot.slane %v385, 1
          %v387 = vadd.f32 %v385, %v386
          %s388 = vtos %v387
          %v389 = vsel %vm298, 1.0, 0.0
          %v390 = vsel %vm367, %v389, 0.0
          %391 = vadd.xlane.f32.xlu0 %v390
          %v392 = vpop.xlane.xlu0 %391
          %v393 = vrot.slane %v392, 4
          %v394 = vadd.f32 %v392, %v393
          %v395 = vrot.slane %v394, 2
          %v396 = vadd.f32 %v394, %v395
          %v397 = vrot.slane %v396, 1
          %v398 = vadd.f32 %v396, %v397
          %s399 = vtos %v398
          %v400 = vlaneseq
          %v401 = vand.u32 %v400, 127
          %vm402 = vcmp.eq.s32.totalorder %v401, 0
          %vm403 = vcmp.eq.s32.totalorder %v401, 1
          %vm404 = vcmp.eq.s32.totalorder %v401, 2
          %v405 = vstv %s399
          %v406 = vsel %vm404, %v405, 0.0
          %v407 = vstv %s388
          %v408 = vsel %vm403, %v407, %v406
          %v409 = vstv %s377
          %v410 = vsel %vm402, %v409, %v408
          %vm411 = vcmask 24576
          %412 = vst.msk [vmem:[%s254] sm:$0x1] %vm411, %v410
        $region40: #{tpu_custom_call.1} parent=31 // pred_fallthru
          _
        %s413 = sand.u32 %s137, 1
        %s414 = scalar_lea.sflag [#allocation6], %s413
        %s415 = sand.u32 %s137, 1
        %s416 = scalar_lea.vmem [#allocation5], %s415
        // Predicated region
        $region41: #{tpu_custom_call.1} parent=31 // pred_check
          %p417 = pneg %p147
        $region42: #{tpu_custom_call.1} parent=31 // pred_check_branch
          %419 = sbr.rel (%p417) target = $region44
        $region43: #{tpu_custom_call.1} parent=31 // pred_region
          %s421 = ssub.s32 16, 16
          %422 = vsyncadd %s414, %s421
          %s423 = sadd.s32 %s26, %s25
          %s424 = smul.addr %s423, 16
          %s425 = scalar_lea.hbm %s5, %s424
          %s427 = sshll.u32 %s416, 4
          %s428 = int_to_ptr.vmem [resolvable:$true] %s427
          %430 = dma.vmem_to_hbm [thread:$0]  %s428, 16, %s425, %s414
        $region44: #{tpu_custom_call.1} parent=31 // pred_fallthru
          _
      $region32: #{tpu_custom_call.1} parent=5 // pred_fallthru
        _
      %p431 = scmp.le.s32.totalorder 2, %s16
      // Predicated region
      $region45: #{tpu_custom_call.1} parent=5 // pred_check
        %p432 = pneg %p431
      $region46: #{tpu_custom_call.1} parent=5 // pred_check_branch
        %434 = sbr.rel (%p432) target = $region48
      $region47: #{tpu_custom_call.1} parent=5 // pred_region
        %s435 = ssub.s32 %s16, 2
        // Predicated region
        $region49: #{tpu_custom_call.1} parent=47 // pred_check
          %p436 = pneg %p153
        $region50: #{tpu_custom_call.1} parent=47 // pred_check_branch
          %438 = sbr.rel (%p436) target = $region52
        $region51: #{tpu_custom_call.1} parent=47 // pred_region
          %s439 = sand.u32 %s138, 1
          %s440 = scalar_lea.sflag [#allocation6], %s439
          %s441 = sand.u32 %s138, 1
          %s442 = scalar_lea.vmem [#allocation5], %s441
          %443 = dma.done %s440, 16
        $region52: #{tpu_custom_call.1} parent=47 // pred_fallthru
          _
      $region48: #{tpu_custom_call.1} parent=5 // pred_fallthru
        _
    $region6: #{tpu_custom_call.1} parent=1 // loop_footer
      %s20 = sadd.s32 1, %s16
    $region7: #{tpu_custom_call.1} parent=1 // loop_footer_branch
      %15 = sbr.rel target = $region3
    $region8: #{tpu_custom_call.1} parent=1 // loop_exit
      _
    %444 = vsyncpa [#allocation6], 1
    %s445 = scalar_lea.sflag [#allocation6], 1
    %446 = vsyncpa %s445, 1

</llo_original>
